<compile_context>
chip_gen: v7x
topology: tpu7x:2x2x1
jax: 0.10.0
libtpu: 0.0.40
codegen_flags: <defaults>
</compile_context>

<pallas_src>
import functools

import jax
import jax.numpy as jnp
from jax.experimental import pallas as pl
from jax.experimental.pallas import tpu as pltpu

BN_EPS = 1e-5
LANE = 128
VMEM_LIMIT = 32 * 1024 * 1024  # fits v7x scoped VMEM; plenty for these tiles


def _round_up(x, n):
    return ((x + n - 1) // n) * n


# -----------------------------------------------------------------------------
# Pass 1: conv tile (bf16 MXU matmul, fp32 acc) + per-channel sum / sum-of-
# squares accumulated over the whole M axis (accumulator pattern, pl.when).
# -----------------------------------------------------------------------------
def conv_stats_kernel(a_ref, w_ref, sum_ref, sq_ref, acc_sum, acc_sq):
    i = pl.program_id(0)

    @pl.when(i == 0)
    def _():
        acc_sum[...] = jnp.zeros_like(acc_sum)
        acc_sq[...] = jnp.zeros_like(acc_sq)

    conv = jnp.dot(a_ref[...], w_ref[...], preferred_element_type=jnp.float32)
    acc_sum[...] += jnp.sum(conv, axis=0, keepdims=True)
    acc_sq[...] += jnp.sum(conv * conv, axis=0, keepdims=True)

    @pl.when(i == pl.num_programs(0) - 1)
    def _():
        sum_ref[...] = acc_sum[...]
        sq_ref[...] = acc_sq[...]


# -----------------------------------------------------------------------------
# Pass 2: recompute conv tile, apply folded BN scale/shift + ReLU.
# -----------------------------------------------------------------------------
def conv_norm_kernel(a_ref, w_ref, scale_ref, shift_ref, o_ref):
    conv = jnp.dot(a_ref[...], w_ref[...], preferred_element_type=jnp.float32)
    y = conv * scale_ref[...] + shift_ref[...]
    o_ref[...] = jnp.maximum(y, 0.0)


def im2col_nhwc(x_nhwc, kh, kw, stride):
    """(N, H, W, C) -> (N*H_out*W_out, kh*kw*C), patch order (kh, kw, c)."""
    n, h, w, c = x_nhwc.shape
    h_out = (h - kh) // stride + 1
    w_out = (w - kw) // stride + 1
    patches = []
    for i in range(kh):
        for j in range(kw):
            patches.append(
                x_nhwc[:, i : i + stride * h_out : stride,
                          j : j + stride * w_out : stride, :]
            )
    p = jnp.stack(patches, axis=-2)  # (N, H_out, W_out, kh*kw, C)
    return p.reshape(n * h_out * w_out, kh * kw * c), h_out, w_out


@functools.partial(jax.jit, static_argnames=("stride",))
def conv_block_forward(x_nchw, weight, bias, gamma, beta, *, stride):
    """ConvBlock forward: Conv2d(3x3, stride, bias) -> BatchNorm2d (batch stats) -> ReLU.

    x_nchw: (N, C_in, H, W) f32; weight: (C_out, C_in, 3, 3); bias/gamma/beta: (C_out,)
    returns (N, C_out, H_out, W_out) f32.
    """
    n, c_in, h, w = x_nchw.shape
    c_out = weight.shape[0]
    kh = kw = 3

    # Conv bias is exactly cancelled by training-mode BatchNorm (the per-channel
    # mean subtraction removes any per-channel constant), so it is unused.
    del bias

    # NCHW -> NHWC (layout glue; see TODO above).
    x_nhwc = jnp.transpose(x_nchw, (0, 2, 3, 1))

    a, h_out, w_out = im2col_nhwc(x_nhwc, kh, kw, stride)
    m, k = a.shape

    # bf16 inputs for the MXU (fp32 accumulation inside the kernel).
    a = a.astype(jnp.bfloat16)

    # Conv weight (C_out, C_in, kh, kw) -> (K, C_out), padded lane-dense to 128.
    c_pad = _round_up(c_out, LANE)
    w_mat = jnp.transpose(weight, (2, 3, 1, 0)).reshape(kh * kw * c_in, c_out)
    w_mat = jnp.pad(w_mat, ((0, 0), (0, c_pad - c_out))).astype(jnp.bfloat16)

    # M tiling; pad rows with zeros (zero rows add nothing to the BN sums, and we
    # divide by the true M below).
    tm = min(512, _round_up(m, 8))
    m_pad = _round_up(m, tm)
    a = jnp.pad(a, ((0, m_pad - m), (0, 0)))
    grid_m = m_pad // tm

    params_reduce = pltpu.CompilerParams(
        dimension_semantics=("arbitrary",), vmem_limit_bytes=VMEM_LIMIT)
    params_parallel = pltpu.CompilerParams(
        dimension_semantics=("parallel",), vmem_limit_bytes=VMEM_LIMIT)

    # ---------------- pass 1: global per-channel sum / sum-of-squares ----------
    col_sum, col_sq = pl.pallas_call(
        conv_stats_kernel,
        out_shape=(jax.ShapeDtypeStruct((1, c_pad), jnp.float32),
                   jax.ShapeDtypeStruct((1, c_pad), jnp.float32)),
        grid=(grid_m,),
        in_specs=[
            pl.BlockSpec((tm, k), lambda i: (i, 0)),
            pl.BlockSpec((k, c_pad), lambda i: (0, 0)),
        ],
        out_specs=(
            pl.BlockSpec((1, c_pad), lambda i: (0, 0)),
            pl.BlockSpec((1, c_pad), lambda i: (0, 0)),
        ),
        scratch_shapes=[
            pltpu.VMEM((1, c_pad), jnp.float32),
            pltpu.VMEM((1, c_pad), jnp.float32),
        ],
        compiler_params=params_reduce,
    )(a, w_mat)

    # Fold BN into one per-channel scale/shift (tiny fp32 math in the wrapper).
    m_f = jnp.float32(m)
    mean = col_sum / m_f
    var = jnp.maximum(col_sq / m_f - mean * mean, 0.0)  # biased var (PyTorch norm)
    inv_std = jax.lax.rsqrt(var + BN_EPS)
    gamma_p = jnp.pad(gamma, (0, c_pad - c_out)).reshape(1, c_pad)
    beta_p = jnp.pad(beta, (0, c_pad - c_out)).reshape(1, c_pad)
    scale = (gamma_p * inv_std).astype(jnp.float32)
    shift = (beta_p - mean * scale).astype(jnp.float32)

    # ---------------- pass 2: conv + folded affine + ReLU ----------------------
    out_flat = pl.pallas_call(
        conv_norm_kernel,
        out_shape=jax.ShapeDtypeStruct((m_pad, c_pad), jnp.float32),
        grid=(grid_m,),
        in_specs=[
            pl.BlockSpec((tm, k), lambda i: (i, 0)),
            pl.BlockSpec((k, c_pad), lambda i: (0, 0)),
            pl.BlockSpec((1, c_pad), lambda i: (0, 0)),
            pl.BlockSpec((1, c_pad), lambda i: (0, 0)),
        ],
        out_specs=pl.BlockSpec((tm, c_pad), lambda i: (i, 0)),
        compiler_params=params_parallel,
    )(a, w_mat, scale, shift)

    # Strip M / channel padding, back to NCHW.
    out_nhwc = out_flat[:m, :c_out].reshape(n, h_out, w_out, c_out)
    return jnp.transpose(out_nhwc, (0, 3, 1, 2))


if __name__ == "__main__":
    key = jax.random.PRNGKey(0)
    k_x, k_w, k_b = jax.random.split(key, 3)

    N, C_IN, H, W = 2, 4, 16, 16
    C_OUT, STRIDE = 8, 1

    x = jax.random.normal(k_x, (N, C_IN, H, W), dtype=jnp.float32)

    # Deterministic params (Conv2d-like fan-in scaling); BN defaults gamma=1, beta=0.
    fan_in = C_IN * 3 * 3
    weight = jax.random.normal(k_w, (C_OUT, C_IN, 3, 3), dtype=jnp.float32) / jnp.sqrt(fan_in)
    bias = jax.random.normal(k_b, (C_OUT,), dtype=jnp.float32) * 0.01
    gamma = jnp.ones((C_OUT,), dtype=jnp.float32)
    beta = jnp.zeros((C_OUT,), dtype=jnp.float32)

    out = conv_block_forward(x, weight, bias, gamma, beta, stride=STRIDE)
    jax.block_until_ready(out)

    h_out = (H - 3) // STRIDE + 1
    w_out = (W - 3) // STRIDE + 1
    assert out.shape == (N, C_OUT, h_out, w_out)
    assert bool(jnp.all(jnp.isfinite(out)))
    assert bool(jnp.all(out >= 0.0))  # ReLU
    print("KERNEL_OK")
</pallas_src>

<mosaic_0001>
module attributes {stable_mosaic.version = 11 : i64} {
  func.func @conv_stats_kernel(%arg0: i32, %arg1: memref<392x36xbf16, #tpu.memory_space<vmem>>, %arg2: memref<36x128xbf16, #tpu.memory_space<vmem>>, %arg3: memref<1x128xf32, #tpu.memory_space<vmem>>, %arg4: memref<1x128xf32, #tpu.memory_space<vmem>>, %arg5: memref<1x128xf32, #tpu.memory_space<vmem>>, %arg6: memref<1x128xf32, #tpu.memory_space<vmem>>) attributes {dimension_semantics = [#tpu.dimension_semantics<arbitrary>], iteration_bounds = array<i64: 1>, scalar_prefetch = 0 : i64, scratch_operands = 2 : i64, tpu.core_type = #tpu.core_type<tc>, window_params = [{transform_indices = @transform_0, window_bounds = array<i64: 392, 36>}, {pipeline_mode = #tpu.pipeline_mode<synchronous>, transform_indices = @transform_1, window_bounds = array<i64: 36, 128>}, {pipeline_mode = #tpu.pipeline_mode<synchronous>, transform_indices = @transform_2, window_bounds = array<i64: 1, 128>}, {pipeline_mode = #tpu.pipeline_mode<synchronous>, transform_indices = @transform_3, window_bounds = array<i64: 1, 128>}]} {
    %c0_i32 = arith.constant 0 : i32
    %0 = arith.cmpi eq, %arg0, %c0_i32 : i32
    %1 = arith.extui %0 : i1 to i32
    %c0_i32_0 = arith.constant 0 : i32
    %2 = arith.cmpi ne, %1, %c0_i32_0 : i32
    scf.if %2 {
      %cst_16 = arith.constant 0.000000e+00 : f32
      %20 = vector.broadcast %cst_16 : f32 to vector<1x128xf32>
      %c0_17 = arith.constant 0 : index
      %c0_18 = arith.constant 0 : index
      %21 = vector.load %arg5[%c0_17, %c0_18] : memref<1x128xf32, #tpu.memory_space<vmem>>, vector<1x128xf32>
      tpu.vector_store %arg5[%c0_17, %c0_18], %20 {strides = array<i32>} : memref<1x128xf32, #tpu.memory_space<vmem>>, vector<1x128xf32>,
      %cst_19 = arith.constant 0.000000e+00 : f32
      %22 = vector.broadcast %cst_19 : f32 to vector<1x128xf32>
      %c0_20 = arith.constant 0 : index
      %c0_21 = arith.constant 0 : index
      %23 = vector.load %arg6[%c0_20, %c0_21] : memref<1x128xf32, #tpu.memory_space<vmem>>, vector<1x128xf32>
      tpu.vector_store %arg6[%c0_20, %c0_21], %22 {strides = array<i32>} : memref<1x128xf32, #tpu.memory_space<vmem>>, vector<1x128xf32>,
    } else {
    }
    %c0 = arith.constant 0 : index
    %c0_1 = arith.constant 0 : index
    %3 = vector.load %arg1[%c0, %c0_1] : memref<392x36xbf16, #tpu.memory_space<vmem>>, vector<392x36xbf16>
    %c0_2 = arith.constant 0 : index
    %c0_3 = arith.constant 0 : index
    %4 = vector.load %arg2[%c0_2, %c0_3] : memref<36x128xbf16, #tpu.memory_space<vmem>>, vector<36x128xbf16>
    %cst = arith.constant dense<0.000000e+00> : vector<392x128xf32>
    %5 = tpu.matmul %3, %4, %cst {dimension_numbers = #tpu.dot_dimension_numbers<[1], [0], [0], [1], [0, 0, 1, 1], [], []>} : vector<392x36xbf16>, vector<36x128xbf16>, vector<392x128xf32> -> vector<392x128xf32>
    %c0_4 = arith.constant 0 : index
    %c0_5 = arith.constant 0 : index
    %6 = vector.load %arg5[%c0_4, %c0_5] : memref<1x128xf32, #tpu.memory_space<vmem>>, vector<1x128xf32>
    %cst_6 = arith.constant dense<0.000000e+00> : vector<128xf32>
    %7 = vector.multi_reduction <add>, %5, %cst_6 [0] : vector<392x128xf32> to vector<128xf32>
    %8 = vector.shape_cast %7 : vector<128xf32> to vector<1x128xf32>
    %9 = arith.addf %6, %8 : vector<1x128xf32>
    %c0_7 = arith.constant 0 : index
    %c0_8 = arith.constant 0 : index
    %10 = vector.load %arg5[%c0_7, %c0_8] : memref<1x128xf32, #tpu.memory_space<vmem>>, vector<1x128xf32>
    tpu.vector_store %arg5[%c0_7, %c0_8], %9 {strides = array<i32>} : memref<1x128xf32, #tpu.memory_space<vmem>>, vector<1x128xf32>,
    %c0_9 = arith.constant 0 : index
    %c0_10 = arith.constant 0 : index
    %11 = vector.load %arg6[%c0_9, %c0_10] : memref<1x128xf32, #tpu.memory_space<vmem>>, vector<1x128xf32>
    %12 = arith.mulf %5, %5 : vector<392x128xf32>
    %cst_11 = arith.constant dense<0.000000e+00> : vector<128xf32>
    %13 = vector.multi_reduction <add>, %12, %cst_11 [0] : vector<392x128xf32> to vector<128xf32>
    %14 = vector.shape_cast %13 : vector<128xf32> to vector<1x128xf32>
    %15 = arith.addf %11, %14 : vector<1x128xf32>
    %c0_12 = arith.constant 0 : index
    %c0_13 = arith.constant 0 : index
    %16 = vector.load %arg6[%c0_12, %c0_13] : memref<1x128xf32, #tpu.memory_space<vmem>>, vector<1x128xf32>
    tpu.vector_store %arg6[%c0_12, %c0_13], %15 {strides = array<i32>} : memref<1x128xf32, #tpu.memory_space<vmem>>, vector<1x128xf32>,
    %c0_i32_14 = arith.constant 0 : i32
    %17 = arith.cmpi eq, %arg0, %c0_i32_14 : i32
    %18 = arith.extui %17 : i1 to i32
    %c0_i32_15 = arith.constant 0 : i32
    %19 = arith.cmpi ne, %18, %c0_i32_15 : i32
    scf.if %19 {
      %c0_16 = arith.constant 0 : index
      %c0_17 = arith.constant 0 : index
      %20 = vector.load %arg5[%c0_16, %c0_17] : memref<1x128xf32, #tpu.memory_space<vmem>>, vector<1x128xf32>
      %c0_18 = arith.constant 0 : index
      %c0_19 = arith.constant 0 : index
      %21 = vector.load %arg3[%c0_18, %c0_19] : memref<1x128xf32, #tpu.memory_space<vmem>>, vector<1x128xf32>
      tpu.vector_store %arg3[%c0_18, %c0_19], %20 {strides = array<i32>} : memref<1x128xf32, #tpu.memory_space<vmem>>, vector<1x128xf32>,
      %c0_20 = arith.constant 0 : index
      %c0_21 = arith.constant 0 : index
      %22 = vector.load %arg6[%c0_20, %c0_21] : memref<1x128xf32, #tpu.memory_space<vmem>>, vector<1x128xf32>
      %c0_22 = arith.constant 0 : index
      %c0_23 = arith.constant 0 : index
      %23 = vector.load %arg4[%c0_22, %c0_23] : memref<1x128xf32, #tpu.memory_space<vmem>>, vector<1x128xf32>
      tpu.vector_store %arg4[%c0_22, %c0_23], %22 {strides = array<i32>} : memref<1x128xf32, #tpu.memory_space<vmem>>, vector<1x128xf32>,
    } else {
    }
    return
  }
  func.func @transform_0(%arg0: i32) -> (i32, i32) {
    %c0_i32 = arith.constant 0 : i32
    %c0_i32_0 = arith.constant 0 : i32
    return %arg0, %c0_i32 : i32, i32
  }
  func.func @transform_1(%arg0: i32) -> (i32, i32) {
    %c0_i32 = arith.constant 0 : i32
    %c0_i32_0 = arith.constant 0 : i32
    %c0_i32_1 = arith.constant 0 : i32
    return %c0_i32, %c0_i32_0 : i32, i32
  }
  func.func @transform_2(%arg0: i32) -> (i32, i32) {
    %c0_i32 = arith.constant 0 : i32
    %c0_i32_0 = arith.constant 0 : i32
    %c0_i32_1 = arith.constant 0 : i32
    return %c0_i32, %c0_i32_0 : i32, i32
  }
  func.func @transform_3(%arg0: i32) -> (i32, i32) {
    %c0_i32 = arith.constant 0 : i32
    %c0_i32_0 = arith.constant 0 : i32
    %c0_i32_1 = arith.constant 0 : i32
    return %c0_i32, %c0_i32_0 : i32, i32
  }
}

module attributes {stable_mosaic.version = 11 : i64} {
  func.func @conv_norm_kernel(%arg0: i32, %arg1: memref<392x36xbf16, #tpu.memory_space<vmem>>, %arg2: memref<36x128xbf16, #tpu.memory_space<vmem>>, %arg3: memref<1x128xf32, #tpu.memory_space<vmem>>, %arg4: memref<1x128xf32, #tpu.memory_space<vmem>>, %arg5: memref<392x128xf32, #tpu.memory_space<vmem>>) attributes {dimension_semantics = [#tpu.dimension_semantics<parallel>], iteration_bounds = array<i64: 1>, scalar_prefetch = 0 : i64, scratch_operands = 0 : i64, tpu.core_type = #tpu.core_type<tc>, window_params = [{transform_indices = @transform_0, window_bounds = array<i64: 392, 36>}, {pipeline_mode = #tpu.pipeline_mode<synchronous>, transform_indices = @transform_1, window_bounds = array<i64: 36, 128>}, {pipeline_mode = #tpu.pipeline_mode<synchronous>, transform_indices = @transform_2, window_bounds = array<i64: 1, 128>}, {pipeline_mode = #tpu.pipeline_mode<synchronous>, transform_indices = @transform_3, window_bounds = array<i64: 1, 128>}, {transform_indices = @transform_4, window_bounds = array<i64: 392, 128>}]} {
    %c0 = arith.constant 0 : index
    %c0_0 = arith.constant 0 : index
    %0 = vector.load %arg1[%c0, %c0_0] : memref<392x36xbf16, #tpu.memory_space<vmem>>, vector<392x36xbf16>
    %c0_1 = arith.constant 0 : index
    %c0_2 = arith.constant 0 : index
    %1 = vector.load %arg2[%c0_1, %c0_2] : memref<36x128xbf16, #tpu.memory_space<vmem>>, vector<36x128xbf16>
    %cst = arith.constant dense<0.000000e+00> : vector<392x128xf32>
    %2 = tpu.matmul %0, %1, %cst {dimension_numbers = #tpu.dot_dimension_numbers<[1], [0], [0], [1], [0, 0, 1, 1], [], []>} : vector<392x36xbf16>, vector<36x128xbf16>, vector<392x128xf32> -> vector<392x128xf32>
    %c0_3 = arith.constant 0 : index
    %c0_4 = arith.constant 0 : index
    %3 = vector.load %arg3[%c0_3, %c0_4] : memref<1x128xf32, #tpu.memory_space<vmem>>, vector<1x128xf32>
    %4 = vector.broadcast %3 : vector<1x128xf32> to vector<392x128xf32>
    %5 = arith.mulf %2, %4 : vector<392x128xf32>
    %c0_5 = arith.constant 0 : index
    %c0_6 = arith.constant 0 : index
    %6 = vector.load %arg4[%c0_5, %c0_6] : memref<1x128xf32, #tpu.memory_space<vmem>>, vector<1x128xf32>
    %7 = vector.broadcast %6 : vector<1x128xf32> to vector<392x128xf32>
    %8 = arith.addf %5, %7 : vector<392x128xf32>
    %cst_7 = arith.constant 0.000000e+00 : f32
    %9 = vector.broadcast %cst_7 : f32 to vector<392x128xf32>
    %10 = arith.maximumf %8, %9 : vector<392x128xf32>
    %c0_8 = arith.constant 0 : index
    %c0_9 = arith.constant 0 : index
    %11 = vector.load %arg5[%c0_8, %c0_9] : memref<392x128xf32, #tpu.memory_space<vmem>>, vector<392x128xf32>
    tpu.vector_store %arg5[%c0_8, %c0_9], %10 {strides = array<i32>} : memref<392x128xf32, #tpu.memory_space<vmem>>, vector<392x128xf32>,
    return
  }
  func.func @transform_0(%arg0: i32) -> (i32, i32) {
    %c0_i32 = arith.constant 0 : i32
    %c0_i32_0 = arith.constant 0 : i32
    return %arg0, %c0_i32 : i32, i32
  }
  func.func @transform_1(%arg0: i32) -> (i32, i32) {
    %c0_i32 = arith.constant 0 : i32
    %c0_i32_0 = arith.constant 0 : i32
    %c0_i32_1 = arith.constant 0 : i32
    return %c0_i32, %c0_i32_0 : i32, i32
  }
  func.func @transform_2(%arg0: i32) -> (i32, i32) {
    %c0_i32 = arith.constant 0 : i32
    %c0_i32_0 = arith.constant 0 : i32
    %c0_i32_1 = arith.constant 0 : i32
    return %c0_i32, %c0_i32_0 : i32, i32
  }
  func.func @transform_3(%arg0: i32) -> (i32, i32) {
    %c0_i32 = arith.constant 0 : i32
    %c0_i32_0 = arith.constant 0 : i32
    %c0_i32_1 = arith.constant 0 : i32
    return %c0_i32, %c0_i32_0 : i32, i32
  }
  func.func @transform_4(%arg0: i32) -> (i32, i32) {
    %c0_i32 = arith.constant 0 : i32
    %c0_i32_0 = arith.constant 0 : i32
    return %arg0, %c0_i32 : i32, i32
  }
}

</mosaic_0001>

<llo_original>
// kernel: conv_block_forward.2
$region0: #{conv_block_forward.2}
  #allocation0 [shape = 'u32[]', space=smem, size = 0x4, offset = 0x4, fixed_abs, tag = 'smem constant byte address 0x4 - core index']
  #allocation1 [shape = 'u32[144,128]{1,0:T(1,128)}', space=vmem, size = 0x12000, scoped, tag = 'internal scratch']
  #allocation2 [shape = 'f32[1,128]{1,0:T(1,128)}', space=vmem, size = 0x200, scoped, tag = 'scratch operand']
  #allocation3 [shape = 'f32[1,128]{1,0:T(1,128)}', space=vmem, size = 0x200, scoped, tag = 'scratch operand']
  %s0 = inlined_call_operand.vmem [shape: bf16[392,36], index: 0, kind: input, shape index: {}]
  %s1 = inlined_call_operand.vmem [shape: bf16[36,128], index: 1, kind: input, shape index: {}]
  %s2 = inlined_call_operand.vmem [shape: f32[1,128], index: 2, kind: output, shape index: {0}]
  %s3 = inlined_call_operand.vmem [shape: f32[1,128], index: 3, kind: output, shape index: {1}]
  %4 = xla_tuple %s2, %s3
  %s5 = sld [smem:[#allocation0]]
  $region34: #{conv_block_forward.2} parent=0
    _
  %s7 = ssub.s32 1, %s5
  %s8 = scalar_select 0, %s7, %s5
  // Predicated region
  $region2: #{conv_block_forward.2} parent=0 // pred_check
    _
  $region3: #{conv_block_forward.2} parent=0 // pred_check_branch
    %10 = sbr.rel (0) target = $region5
  $region4: #{conv_block_forward.2} parent=0 // pred_region
    _
  $region5: #{conv_block_forward.2} parent=0 // pred_fallthru
    _
  // Predicated region
  $region6: #{conv_block_forward.2} parent=0 // pred_check
    _
  $region7: #{conv_block_forward.2} parent=0 // pred_check_branch
    %12 = sbr.rel (0) target = $region9
  $region8: #{conv_block_forward.2} parent=0 // pred_region
    _
  $region9: #{conv_block_forward.2} parent=0 // pred_fallthru
    _
  %p14 = scmp.eq.s32.totalorder 0, 0
  // Predicated region
  $region10: #{conv_block_forward.2} parent=0 // pred_check
    %p15 = pneg %p14
  $region11: #{conv_block_forward.2} parent=0 // pred_check_branch
    %17 = sbr.rel (%p15) target = $region13
  $region12: #{conv_block_forward.2} parent=0 // pred_region
    %18 = vst [vmem:[#allocation2] sm:$0x1] 0.0
    %19 = vst [vmem:[#allocation3] sm:$0x1] 0.0
  $region13: #{conv_block_forward.2} parent=0 // pred_fallthru
    _
  %v20 = vld [vmem:[%s0] sm:$0xf]
  %v21 = vld [vmem:[%s0 + $0x4] sm:$0xf]
  %v22 = vld [vmem:[%s0 + $0x8] sm:$0xf]
  %v23 = vld [vmem:[%s0 + $0xc] sm:$0xf]
  %v24 = vld [vmem:[%s0 + $0x10] sm:$0xf]
  %v25 = vld [vmem:[%s0 + $0x14] sm:$0xf]
  %v26 = vld [vmem:[%s0 + $0x18] sm:$0xf]
  %v27 = vld [vmem:[%s0 + $0x1c] sm:$0xf]
  %v28 = vld [vmem:[%s0 + $0x20] sm:$0xf]
  %v29 = vld [vmem:[%s0 + $0x24] sm:$0xf]
  %v30 = vld [vmem:[%s0 + $0x28] sm:$0xf]
  %v31 = vld [vmem:[%s0 + $0x2c] sm:$0xf]
  %v32 = vld [vmem:[%s0 + $0x30] sm:$0xf]
  %v33 = vld [vmem:[%s0 + $0x34] sm:$0xf]
  %v34 = vld [vmem:[%s0 + $0x38] sm:$0xf]
  %v35 = vld [vmem:[%s0 + $0x3c] sm:$0xf]
  %v36 = vld [vmem:[%s0 + $0x40] sm:$0xf]
  %v37 = vld [vmem:[%s0 + $0x44] sm:$0xf]
  %v38 = vld [vmem:[%s0 + $0x48] sm:$0xf]
  %v39 = vld [vmem:[%s0 + $0x4c] sm:$0xf]
  %v40 = vld [vmem:[%s0 + $0x50] sm:$0xf]
  %v41 = vld [vmem:[%s0 + $0x54] sm:$0xf]
  %v42 = vld [vmem:[%s0 + $0x58] sm:$0xf]
  %v43 = vld [vmem:[%s0 + $0x5c] sm:$0xf]
  %v44 = vld [vmem:[%s0 + $0x60] sm:$0xf]
  %v45 = vld [vmem:[%s0 + $0x64] sm:$0xf]
  %v46 = vld [vmem:[%s0 + $0x68] sm:$0xf]
  %v47 = vld [vmem:[%s0 + $0x6c] sm:$0xf]
  %v48 = vld [vmem:[%s0 + $0x70] sm:$0xf]
  %v49 = vld [vmem:[%s0 + $0x74] sm:$0xf]
  %v50 = vld [vmem:[%s0 + $0x78] sm:$0xf]
  %v51 = vld [vmem:[%s0 + $0x7c] sm:$0xf]
  %v52 = vld [vmem:[%s0 + $0x80] sm:$0xf]
  %v53 = vld [vmem:[%s0 + $0x84] sm:$0xf]
  %v54 = vld [vmem:[%s0 + $0x88] sm:$0xf]
  %v55 = vld [vmem:[%s0 + $0x8c] sm:$0xf]
  %v56 = vld [vmem:[%s0 + $0x90] sm:$0xf]
  %v57 = vld [vmem:[%s0 + $0x94] sm:$0xf]
  %v58 = vld [vmem:[%s0 + $0x98] sm:$0xf]
  %v59 = vld [vmem:[%s0 + $0x9c] sm:$0xf]
  %v60 = vld [vmem:[%s0 + $0xa0] sm:$0xf]
  %v61 = vld [vmem:[%s0 + $0xa4] sm:$0xf]
  %v62 = vld [vmem:[%s0 + $0xa8] sm:$0xf]
  %v63 = vld [vmem:[%s0 + $0xac] sm:$0xf]
  %v64 = vld [vmem:[%s0 + $0xb0] sm:$0xf]
  %v65 = vld [vmem:[%s0 + $0xb4] sm:$0xf]
  %v66 = vld [vmem:[%s0 + $0xb8] sm:$0xf]
  %v67 = vld [vmem:[%s0 + $0xbc] sm:$0xf]
  %v68 = vld [vmem:[%s0 + $0xc0] sm:$0xf]
  %v69 = vld [vmem:[%s1] sm:$0xf]
  %v70 = vld [vmem:[%s1 + $0x4] sm:$0xf]
  %v71 = vld [vmem:[%s1 + $0x8] sm:$0xf]
  %v72 = vld [vmem:[%s1 + $0xc] sm:$0xf]
  %v73 = vld [vmem:[%s1 + $0x10] sm:$0x3]
  %v123 = vunpack.c.l.b16 %v20
  %v124 = vunpack.c.l.b16 %v21
  %v125 = vunpack.c.l.b16 %v22
  %v126 = vunpack.c.l.b16 %v23
  %v127 = vunpack.c.l.b16 %v24
  %v128 = vunpack.c.l.b16 %v25
  %v129 = vunpack.c.l.b16 %v26
  %v130 = vunpack.c.l.b16 %v27
  %v131 = vunpack.c.l.b16 %v28
  %v132 = vunpack.c.l.b16 %v29
  %v133 = vunpack.c.l.b16 %v30
  %v134 = vunpack.c.l.b16 %v31
  %v135 = vunpack.c.l.b16 %v32
  %v136 = vunpack.c.l.b16 %v33
  %v137 = vunpack.c.l.b16 %v34
  %v138 = vunpack.c.l.b16 %v35
  %v139 = vunpack.c.l.b16 %v36
  %v140 = vunpack.c.l.b16 %v37
  %v141 = vunpack.c.l.b16 %v38
  %v142 = vunpack.c.l.b16 %v39
  %v143 = vunpack.c.l.b16 %v40
  %v144 = vunpack.c.l.b16 %v41
  %v145 = vunpack.c.l.b16 %v42
  %v146 = vunpack.c.l.b16 %v43
  %v147 = vunpack.c.l.b16 %v44
  %v148 = vunpack.c.l.b16 %v45
  %v149 = vunpack.c.l.b16 %v46
  %v150 = vunpack.c.l.b16 %v47
  %v151 = vunpack.c.l.b16 %v48
  %v152 = vunpack.c.l.b16 %v49
  %v153 = vunpack.c.l.b16 %v50
  %v154 = vunpack.c.l.b16 %v51
  %v155 = vunpack.c.l.b16 %v52
  %v156 = vunpack.c.l.b16 %v53
  %v157 = vunpack.c.l.b16 %v54
  %v158 = vunpack.c.l.b16 %v55
  %v159 = vunpack.c.l.b16 %v56
  %v160 = vunpack.c.l.b16 %v57
  %v161 = vunpack.c.l.b16 %v58
  %v162 = vunpack.c.l.b16 %v59
  %v163 = vunpack.c.l.b16 %v60
  %v164 = vunpack.c.l.b16 %v61
  %v165 = vunpack.c.l.b16 %v62
  %v166 = vunpack.c.l.b16 %v63
  %v167 = vunpack.c.l.b16 %v64
  %v168 = vunpack.c.l.b16 %v65
  %v169 = vunpack.c.l.b16 %v66
  %v170 = vunpack.c.l.b16 %v67
  %v171 = vunpack.c.l.b16 %v68
  %v172 = vpack.c.b16 %v124, %v123
  %v173 = vpack.c.b16 %v126, %v125
  %v174 = vpack.c.b16 %v128, %v127
  %v175 = vpack.c.b16 %v130, %v129
  %v176 = vpack.c.b16 %v132, %v131
  %v177 = vpack.c.b16 %v134, %v133
  %v178 = vpack.c.b16 %v136, %v135
  %v179 = vpack.c.b16 %v138, %v137
  %v180 = vpack.c.b16 %v140, %v139
  %v181 = vpack.c.b16 %v142, %v141
  %v182 = vpack.c.b16 %v144, %v143
  %v183 = vpack.c.b16 %v146, %v145
  %v184 = vpack.c.b16 %v148, %v147
  %v185 = vpack.c.b16 %v150, %v149
  %v186 = vpack.c.b16 %v152, %v151
  %v187 = vpack.c.b16 %v154, %v153
  %v188 = vpack.c.b16 %v156, %v155
  %v189 = vpack.c.b16 %v158, %v157
  %v190 = vpack.c.b16 %v160, %v159
  %v191 = vpack.c.b16 %v162, %v161
  %v192 = vpack.c.b16 %v164, %v163
  %v193 = vpack.c.b16 %v166, %v165
  %v194 = vpack.c.b16 %v168, %v167
  %v195 = vpack.c.b16 %v170, %v169
  %v196 = vpack.c.b16 %v171, %v171
  %v202 = vunpack.c.l.b16 %v69
  %v203 = vunpack.c.l.b16 %v70
  %v204 = vunpack.c.l.b16 %v71
  %v205 = vunpack.c.l.b16 %v72
  %v206 = vunpack.c.l.b16 %v73
  %v207 = vpack.c.b16 %v203, %v202
  %v208 = vpack.c.b16 %v205, %v204
  %v209 = vpack.c.b16 %v206, %v206
  %vm212 = vcmask 293888
  %v214 = vsel %vm212, %v172, 0
  %v217 = vsel %vm212, %v173, 0
  %v220 = vsel %vm212, %v174, 0
  %v223 = vsel %vm212, %v175, 0
  %v226 = vsel %vm212, %v176, 0
  %v229 = vsel %vm212, %v177, 0
  %v232 = vsel %vm212, %v178, 0
  %v235 = vsel %vm212, %v179, 0
  %v238 = vsel %vm212, %v180, 0
  %v241 = vsel %vm212, %v181, 0
  %v244 = vsel %vm212, %v182, 0
  %v247 = vsel %vm212, %v183, 0
  %v250 = vsel %vm212, %v184, 0
  %v253 = vsel %vm212, %v185, 0
  %v256 = vsel %vm212, %v186, 0
  %v259 = vsel %vm212, %v187, 0
  %v262 = vsel %vm212, %v188, 0
  %v265 = vsel %vm212, %v189, 0
  %v268 = vsel %vm212, %v190, 0
  %v271 = vsel %vm212, %v191, 0
  %v274 = vsel %vm212, %v192, 0
  %v277 = vsel %vm212, %v193, 0
  %v280 = vsel %vm212, %v194, 0
  %v283 = vsel %vm212, %v195, 0
  %v286 = vsel %vm212, %v196, 0
  %vm288 = vcmask 1041408
  %v290 = vsel %vm288, %v209, 0
  %292 = vmatprep.subr.bf16.mxu0 0
  %293 = vmatpush1.bf16.msra.mxu0 %v207
  %294 = vmatprep.subr.bf16.mxu0 0
  %295 = vmatpush1.bf16.msra.mxu0 %v208
  %296 = vmatprep.subr.bf16.mxu0 0
  %297 = vmatpush1.bf16.msra.mxu0 %v290
  %298 = vmatprep.subr.bf16.mxu0 0
  %299 = vmatpush1.bf16.msra.mxu0 0
  %300 = vmatprep.subr.bf16.mxu0 0
  %301 = vmatpush1.bf16.msra.mxu0 0
  %302 = vmatprep.subr.bf16.mxu0 0
  %303 = vmatpush1.bf16.msra.mxu0 0
  %304 = vmatprep.subr.bf16.mxu0 0
  %305 = vmatpush1.bf16.msra.mxu0 0
  %306 = vmatprep.subr.bf16.mxu0 0
  %307 = vmatpush1.bf16.msra.mxu0 0
  %308 = vmatprep.subr.bf16.mxu0 0
  %309 = vmatpush1.bf16.msra.mxu0 0
  %310 = vmatprep.subr.bf16.mxu0 0
  %311 = vmatpush1.bf16.msra.mxu0 0
  %312 = vmatprep.subr.bf16.mxu0 0
  %313 = vmatpush1.bf16.msra.mxu0 0
  %314 = vmatprep.subr.bf16.mxu0 0
  %315 = vmatpush1.bf16.msra.mxu0 0
  %316 = vmatprep.subr.bf16.mxu0 0
  %317 = vmatpush1.bf16.msra.mxu0 0
  %318 = vmatprep.subr.bf16.mxu0 0
  %319 = vmatpush1.bf16.msra.mxu0 0
  %320 = vmatprep.subr.bf16.mxu0 0
  %321 = vmatpush1.bf16.msra.mxu0 0
  %322 = vmatprep.subr.bf16.mxu0 0
  %323 = vmatpush1.bf16.msra.mxu0 0
  %324 = vmatprep.mubr.bf16.mxu0 0
  %325 = vmatmul.mubr.bf16.gmra.mrb[0].mxu0 %v214
  %v326 = vpop.f32.mrb[0].mxu0
  %v327 = vadd.f32 0.0, %v326
  %v328 = vpop.f32.mrb[0].mxu0
  %v329 = vpop.f32.mrb[0].mxu0
  %v330 = vadd.f32 0.0, %v329
  %v331 = vpop.f32.mrb[0].mxu0
  %332 = vmatprep.mubr.bf16.mxu0 0
  %333 = vmatmul.mubr.bf16.gmra.mrb[0].mxu0 %v217
  %v334 = vpop.f32.mrb[0].mxu0
  %v335 = vadd.f32 0.0, %v334
  %v336 = vpop.f32.mrb[0].mxu0
  %v337 = vpop.f32.mrb[0].mxu0
  %v338 = vadd.f32 0.0, %v337
  %v339 = vpop.f32.mrb[0].mxu0
  %340 = vmatprep.mubr.bf16.mxu0 0
  %341 = vmatmul.mubr.bf16.gmra.mrb[0].mxu0 %v220
  %v342 = vpop.f32.mrb[0].mxu0
  %v343 = vadd.f32 0.0, %v342
  %v344 = vpop.f32.mrb[0].mxu0
  %v345 = vpop.f32.mrb[0].mxu0
  %v346 = vadd.f32 0.0, %v345
  %v347 = vpop.f32.mrb[0].mxu0
  %348 = vmatprep.mubr.bf16.mxu0 0
  %349 = vmatmul.mubr.bf16.gmra.mrb[0].mxu0 %v223
  %v350 = vpop.f32.mrb[0].mxu0
  %v351 = vadd.f32 0.0, %v350
  %v352 = vpop.f32.mrb[0].mxu0
  %v353 = vpop.f32.mrb[0].mxu0
  %v354 = vadd.f32 0.0, %v353
  %v355 = vpop.f32.mrb[0].mxu0
  %356 = vmatprep.mubr.bf16.mxu0 0
  %357 = vmatmul.mubr.bf16.gmra.mrb[0].mxu0 %v226
  %v358 = vpop.f32.mrb[0].mxu0
  %v359 = vadd.f32 0.0, %v358
  %v360 = vpop.f32.mrb[0].mxu0
  %v361 = vpop.f32.mrb[0].mxu0
  %v362 = vadd.f32 0.0, %v361
  %v363 = vpop.f32.mrb[0].mxu0
  %364 = vmatprep.mubr.bf16.mxu0 0
  %365 = vmatmul.mubr.bf16.gmra.mrb[0].mxu0 %v229
  %v366 = vpop.f32.mrb[0].mxu0
  %v367 = vadd.f32 0.0, %v366
  %v368 = vpop.f32.mrb[0].mxu0
  %v369 = vpop.f32.mrb[0].mxu0
  %v370 = vadd.f32 0.0, %v369
  %v371 = vpop.f32.mrb[0].mxu0
  %372 = vmatprep.mubr.bf16.mxu0 0
  %373 = vmatmul.mubr.bf16.gmra.mrb[0].mxu0 %v232
  %v374 = vpop.f32.mrb[0].mxu0
  %v375 = vadd.f32 0.0, %v374
  %v376 = vpop.f32.mrb[0].mxu0
  %v377 = vpop.f32.mrb[0].mxu0
  %v378 = vadd.f32 0.0, %v377
  %v379 = vpop.f32.mrb[0].mxu0
  %380 = vmatprep.mubr.bf16.mxu0 0
  %381 = vmatmul.mubr.bf16.gmra.mrb[0].mxu0 %v235
  %v382 = vpop.f32.mrb[0].mxu0
  %v383 = vadd.f32 0.0, %v382
  %v384 = vpop.f32.mrb[0].mxu0
  %v385 = vpop.f32.mrb[0].mxu0
  %v386 = vadd.f32 0.0, %v385
  %v387 = vpop.f32.mrb[0].mxu0
  %388 = vmatprep.mubr.bf16.mxu0 0
  %389 = vmatmul.mubr.bf16.gmra.mrb[0].mxu0 %v238
  %v390 = vpop.f32.mrb[0].mxu0
  %v391 = vadd.f32 0.0, %v390
  %v392 = vpop.f32.mrb[0].mxu0
  %v393 = vpop.f32.mrb[0].mxu0
  %v394 = vadd.f32 0.0, %v393
  %v395 = vpop.f32.mrb[0].mxu0
  %396 = vmatprep.mubr.bf16.mxu0 0
  %397 = vmatmul.mubr.bf16.gmra.mrb[0].mxu0 %v241
  %v398 = vpop.f32.mrb[0].mxu0
  %v399 = vadd.f32 0.0, %v398
  %v400 = vpop.f32.mrb[0].mxu0
  %v401 = vpop.f32.mrb[0].mxu0
  %v402 = vadd.f32 0.0, %v401
  %v403 = vpop.f32.mrb[0].mxu0
  %404 = vmatprep.mubr.bf16.mxu0 0
  %405 = vmatmul.mubr.bf16.gmra.mrb[0].mxu0 %v244
  %v406 = vpop.f32.mrb[0].mxu0
  %v407 = vadd.f32 0.0, %v406
  %v408 = vpop.f32.mrb[0].mxu0
  %v409 = vpop.f32.mrb[0].mxu0
  %v410 = vadd.f32 0.0, %v409
  %v411 = vpop.f32.mrb[0].mxu0
  %412 = vmatprep.mubr.bf16.mxu0 0
  %413 = vmatmul.mubr.bf16.gmra.mrb[0].mxu0 %v247
  %v414 = vpop.f32.mrb[0].mxu0
  %v415 = vadd.f32 0.0, %v414
  %v416 = vpop.f32.mrb[0].mxu0
  %v417 = vpop.f32.mrb[0].mxu0
  %v418 = vadd.f32 0.0, %v417
  %v419 = vpop.f32.mrb[0].mxu0
  %420 = vmatprep.mubr.bf16.mxu0 0
  %421 = vmatmul.mubr.bf16.gmra.mrb[0].mxu0 %v250
  %v422 = vpop.f32.mrb[0].mxu0
  %v423 = vadd.f32 0.0, %v422
  %v424 = vpop.f32.mrb[0].mxu0
  %v425 = vpop.f32.mrb[0].mxu0
  %v426 = vadd.f32 0.0, %v425
  %v427 = vpop.f32.mrb[0].mxu0
  %428 = vmatprep.mubr.bf16.mxu0 0
  %429 = vmatmul.mubr.bf16.gmra.mrb[0].mxu0 %v253
  %v430 = vpop.f32.mrb[0].mxu0
  %v431 = vadd.f32 0.0, %v430
  %v432 = vpop.f32.mrb[0].mxu0
  %v433 = vpop.f32.mrb[0].mxu0
  %v434 = vadd.f32 0.0, %v433
  %v435 = vpop.f32.mrb[0].mxu0
  %436 = vmatprep.mubr.bf16.mxu0 0
  %437 = vmatmul.mubr.bf16.gmra.mrb[0].mxu0 %v256
  %v438 = vpop.f32.mrb[0].mxu0
  %v439 = vadd.f32 0.0, %v438
  %v440 = vpop.f32.mrb[0].mxu0
  %v441 = vpop.f32.mrb[0].mxu0
  %v442 = vadd.f32 0.0, %v441
  %v443 = vpop.f32.mrb[0].mxu0
  %444 = vmatprep.mubr.bf16.mxu0 0
  %445 = vmatmul.mubr.bf16.gmra.mrb[0].mxu0 %v259
  %v446 = vpop.f32.mrb[0].mxu0
  %v447 = vadd.f32 0.0, %v446
  %v448 = vpop.f32.mrb[0].mxu0
  %v449 = vpop.f32.mrb[0].mxu0
  %v450 = vadd.f32 0.0, %v449
  %v451 = vpop.f32.mrb[0].mxu0
  %452 = vmatprep.mubr.bf16.mxu0 0
  %453 = vmatmul.mubr.bf16.gmra.mrb[0].mxu0 %v262
  %v454 = vpop.f32.mrb[0].mxu0
  %v455 = vadd.f32 0.0, %v454
  %v456 = vpop.f32.mrb[0].mxu0
  %v457 = vpop.f32.mrb[0].mxu0
  %v458 = vadd.f32 0.0, %v457
  %v459 = vpop.f32.mrb[0].mxu0
  %460 = vmatprep.mubr.bf16.mxu0 0
  %461 = vmatmul.mubr.bf16.gmra.mrb[0].mxu0 %v265
  %v462 = vpop.f32.mrb[0].mxu0
  %v463 = vadd.f32 0.0, %v462
  %v464 = vpop.f32.mrb[0].mxu0
  %v465 = vpop.f32.mrb[0].mxu0
  %v466 = vadd.f32 0.0, %v465
  %v467 = vpop.f32.mrb[0].mxu0
  %468 = vmatprep.mubr.bf16.mxu0 0
  %469 = vmatmul.mubr.bf16.gmra.mrb[0].mxu0 %v268
  %v470 = vpop.f32.mrb[0].mxu0
  %v471 = vadd.f32 0.0, %v470
  %v472 = vpop.f32.mrb[0].mxu0
  %v473 = vpop.f32.mrb[0].mxu0
  %v474 = vadd.f32 0.0, %v473
  %v475 = vpop.f32.mrb[0].mxu0
  %476 = vmatprep.mubr.bf16.mxu0 0
  %477 = vmatmul.mubr.bf16.gmra.mrb[0].mxu0 %v271
  %v478 = vpop.f32.mrb[0].mxu0
  %v479 = vadd.f32 0.0, %v478
  %v480 = vpop.f32.mrb[0].mxu0
  %v481 = vpop.f32.mrb[0].mxu0
  %v482 = vadd.f32 0.0, %v481
  %v483 = vpop.f32.mrb[0].mxu0
  %484 = vmatprep.mubr.bf16.mxu0 0
  %485 = vmatmul.mubr.bf16.gmra.mrb[0].mxu0 %v274
  %v486 = vpop.f32.mrb[0].mxu0
  %v487 = vadd.f32 0.0, %v486
  %v488 = vpop.f32.mrb[0].mxu0
  %v489 = vpop.f32.mrb[0].mxu0
  %v490 = vadd.f32 0.0, %v489
  %v491 = vpop.f32.mrb[0].mxu0
  %492 = vmatprep.mubr.bf16.mxu0 0
  %493 = vmatmul.mubr.bf16.gmra.mrb[0].mxu0 %v277
  %v494 = vpop.f32.mrb[0].mxu0
  %v495 = vadd.f32 0.0, %v494
  %v496 = vpop.f32.mrb[0].mxu0
  %v497 = vpop.f32.mrb[0].mxu0
  %v498 = vadd.f32 0.0, %v497
  %v499 = vpop.f32.mrb[0].mxu0
  %500 = vmatprep.mubr.bf16.mxu0 0
  %501 = vmatmul.mubr.bf16.gmra.mrb[0].mxu0 %v280
  %v502 = vpop.f32.mrb[0].mxu0
  %v503 = vadd.f32 0.0, %v502
  %v504 = vpop.f32.mrb[0].mxu0
  %v505 = vpop.f32.mrb[0].mxu0
  %v506 = vadd.f32 0.0, %v505
  %v507 = vpop.f32.mrb[0].mxu0
  %508 = vmatprep.mubr.bf16.mxu0 0
  %509 = vmatmul.mubr.bf16.gmra.mrb[0].mxu0 %v283
  %v510 = vpop.f32.mrb[0].mxu0
  %v511 = vadd.f32 0.0, %v510
  %v512 = vpop.f32.mrb[0].mxu0
  %v513 = vpop.f32.mrb[0].mxu0
  %v514 = vadd.f32 0.0, %v513
  %v515 = vpop.f32.mrb[0].mxu0
  %516 = vmatprep.mubr.bf16.mxu0 0
  %517 = vmatmul.mubr.bf16.gmra.mrb[0].mxu0 %v286
  %v518 = vpop.f32.mrb[0].mxu0
  %v519 = vadd.f32 0.0, %v518
  %v520 = vpop.f32.mrb[0].mxu0
  %v521 = vpop.f32.mrb[0].mxu0
  %v522 = vpop.f32.mrb[0].mxu0
  %523 = vdwg.mxu0
  %v524 = vld [vmem:[#allocation2] sm:$0x1]
  %v525 = vadd.f32 %v327, %v330
  %v526 = vadd.f32 %v525, %v335
  %v527 = vadd.f32 %v526, %v338
  %v528 = vadd.f32 %v527, %v343
  %v529 = vadd.f32 %v528, %v346
  %v530 = vadd.f32 %v529, %v351
  %v531 = vadd.f32 %v530, %v354
  %v532 = vadd.f32 %v531, %v359
  %v533 = vadd.f32 %v532, %v362
  %v534 = vadd.f32 %v533, %v367
  %v535 = vadd.f32 %v534, %v370
  %v536 = vadd.f32 %v535, %v375
  %v537 = vadd.f32 %v536, %v378
  %v538 = vadd.f32 %v537, %v383
  %v539 = vadd.f32 %v538, %v386
  %v540 = vadd.f32 %v539, %v391
  %v541 = vadd.f32 %v540, %v394
  %v542 = vadd.f32 %v541, %v399
  %v543 = vadd.f32 %v542, %v402
  %v544 = vadd.f32 %v543, %v407
  %v545 = vadd.f32 %v544, %v410
  %v546 = vadd.f32 %v545, %v415
  %v547 = vadd.f32 %v546, %v418
  %v548 = vadd.f32 %v547, %v423
  %v549 = vadd.f32 %v548, %v426
  %v550 = vadd.f32 %v549, %v431
  %v551 = vadd.f32 %v550, %v434
  %v552 = vadd.f32 %v551, %v439
  %v553 = vadd.f32 %v552, %v442
  %v554 = vadd.f32 %v553, %v447
  %v555 = vadd.f32 %v554, %v450
  %v556 = vadd.f32 %v555, %v455
  %v557 = vadd.f32 %v556, %v458
  %v558 = vadd.f32 %v557, %v463
  %v559 = vadd.f32 %v558, %v466
  %v560 = vadd.f32 %v559, %v471
  %v561 = vadd.f32 %v560, %v474
  %v562 = vadd.f32 %v561, %v479
  %v563 = vadd.f32 %v562, %v482
  %v564 = vadd.f32 %v563, %v487
  %v565 = vadd.f32 %v564, %v490
  %v566 = vadd.f32 %v565, %v495
  %v567 = vadd.f32 %v566, %v498
  %v568 = vadd.f32 %v567, %v503
  %v569 = vadd.f32 %v568, %v506
  %v570 = vadd.f32 %v569, %v511
  %v571 = vadd.f32 %v570, %v514
  %v572 = vadd.f32 %v571, %v519
  %v573 = vrot.slane %v572, 4
  %v574 = vadd.f32 %v572, %v573
  %v575 = vrot.slane %v574, 2
  %v576 = vadd.f32 %v574, %v575
  %v577 = vrot.slane %v576, 1
  %v578 = vadd.f32 %v576, %v577
  %v579 = vadd.f32 %v524, %v578
  %580 = vst [vmem:[#allocation2] sm:$0x1] %v579
  %v581 = vld [vmem:[#allocation3] sm:$0x1]
  %v582 = vmul.f32 %v327, %v327
  %v583 = vmul.f32 %v330, %v330
  %v584 = vmul.f32 %v335, %v335
  %v585 = vmul.f32 %v338, %v338
  %v586 = vmul.f32 %v343, %v343
  %v587 = vmul.f32 %v346, %v346
  %v588 = vmul.f32 %v351, %v351
  %v589 = vmul.f32 %v354, %v354
  %v590 = vmul.f32 %v359, %v359
  %v591 = vmul.f32 %v362, %v362
  %v592 = vmul.f32 %v367, %v367
  %v593 = vmul.f32 %v370, %v370
  %v594 = vmul.f32 %v375, %v375
  %v595 = vmul.f32 %v378, %v378
  %v596 = vmul.f32 %v383, %v383
  %v597 = vmul.f32 %v386, %v386
  %v598 = vmul.f32 %v391, %v391
  %v599 = vmul.f32 %v394, %v394
  %v600 = vmul.f32 %v399, %v399
  %v601 = vmul.f32 %v402, %v402
  %v602 = vmul.f32 %v407, %v407
  %v603 = vmul.f32 %v410, %v410
  %v604 = vmul.f32 %v415, %v415
  %v605 = vmul.f32 %v418, %v418
  %v606 = vmul.f32 %v423, %v423
  %v607 = vmul.f32 %v426, %v426
  %v608 = vmul.f32 %v431, %v431
  %v609 = vmul.f32 %v434, %v434
  %v610 = vmul.f32 %v439, %v439
  %v611 = vmul.f32 %v442, %v442
  %v612 = vmul.f32 %v447, %v447
  %v613 = vmul.f32 %v450, %v450
  %v614 = vmul.f32 %v455, %v455
  %v615 = vmul.f32 %v458, %v458
  %v616 = vmul.f32 %v463, %v463
  %v617 = vmul.f32 %v466, %v466
  %v618 = vmul.f32 %v471, %v471
  %v619 = vmul.f32 %v474, %v474
  %v620 = vmul.f32 %v479, %v479
  %v621 = vmul.f32 %v482, %v482
  %v622 = vmul.f32 %v487, %v487
  %v623 = vmul.f32 %v490, %v490
  %v624 = vmul.f32 %v495, %v495
  %v625 = vmul.f32 %v498, %v498
  %v626 = vmul.f32 %v503, %v503
  %v627 = vmul.f32 %v506, %v506
  %v628 = vmul.f32 %v511, %v511
  %v629 = vmul.f32 %v514, %v514
  %v630 = vmul.f32 %v519, %v519
  %v631 = vadd.f32 %v582, %v583
  %v632 = vadd.f32 %v631, %v584
  %v633 = vadd.f32 %v632, %v585
  %v634 = vadd.f32 %v633, %v586
  %v635 = vadd.f32 %v634, %v587
  %v636 = vadd.f32 %v635, %v588
  %v637 = vadd.f32 %v636, %v589
  %v638 = vadd.f32 %v637, %v590
  %v639 = vadd.f32 %v638, %v591
  %v640 = vadd.f32 %v639, %v592
  %v641 = vadd.f32 %v640, %v593
  %v642 = vadd.f32 %v641, %v594
  %v643 = vadd.f32 %v642, %v595
  %v644 = vadd.f32 %v643, %v596
  %v645 = vadd.f32 %v644, %v597
  %v646 = vadd.f32 %v645, %v598
  %v647 = vadd.f32 %v646, %v599
  %v648 = vadd.f32 %v647, %v600
  %v649 = vadd.f32 %v648, %v601
  %v650 = vadd.f32 %v649, %v602
  %v651 = vadd.f32 %v650, %v603
  %v652 = vadd.f32 %v651, %v604
  %v653 = vadd.f32 %v652, %v605
  %v654 = vadd.f32 %v653, %v606
  %v655 = vadd.f32 %v654, %v607
  %v656 = vadd.f32 %v655, %v608
  %v657 = vadd.f32 %v656, %v609
  %v658 = vadd.f32 %v657, %v610
  %v659 = vadd.f32 %v658, %v611
  %v660 = vadd.f32 %v659, %v612
  %v661 = vadd.f32 %v660, %v613
  %v662 = vadd.f32 %v661, %v614
  %v663 = vadd.f32 %v662, %v615
  %v664 = vadd.f32 %v663, %v616
  %v665 = vadd.f32 %v664, %v617
  %v666 = vadd.f32 %v665, %v618
  %v667 = vadd.f32 %v666, %v619
  %v668 = vadd.f32 %v667, %v620
  %v669 = vadd.f32 %v668, %v621
  %v670 = vadd.f32 %v669, %v622
  %v671 = vadd.f32 %v670, %v623
  %v672 = vadd.f32 %v671, %v624
  %v673 = vadd.f32 %v672, %v625
  %v674 = vadd.f32 %v673, %v626
  %v675 = vadd.f32 %v674, %v627
  %v676 = vadd.f32 %v675, %v628
  %v677 = vadd.f32 %v676, %v629
  %v678 = vadd.f32 %v677, %v630
  %v679 = vrot.slane %v678, 4
  %v680 = vadd.f32 %v678, %v679
  %v681 = vrot.slane %v680, 2
  %v682 = vadd.f32 %v680, %v681
  %v683 = vrot.slane %v682, 1
  %v684 = vadd.f32 %v682, %v683
  %v685 = vadd.f32 %v581, %v684
  %686 = vst [vmem:[#allocation3] sm:$0x1] %v685
  // Predicated region
  $region14: #{conv_block_forward.2} parent=0 // pred_check
    %p687 = pneg %p14
  $region15: #{conv_block_forward.2} parent=0 // pred_check_branch
    %689 = sbr.rel (%p687) target = $region17
  $region16: #{conv_block_forward.2} parent=0 // pred_region
    %v690 = vld [vmem:[#allocation2] sm:$0x1]
    %691 = vst [vmem:[%s2] sm:$0x1] %v690
    %v692 = vld [vmem:[#allocation3] sm:$0x1]
    %693 = vst [vmem:[%s3] sm:$0x1] %v692
  $region17: #{conv_block_forward.2} parent=0 // pred_fallthru
    _
  // Predicated region
  $region18: #{conv_block_forward.2} parent=0 // pred_check
    _
  $region19: #{conv_block_forward.2} parent=0 // pred_check_branch
    %695 = sbr.rel (0) target = $region21
  $region20: #{conv_block_forward.2} parent=0 // pred_region
    _
  $region21: #{conv_block_forward.2} parent=0 // pred_fallthru
    _
  // Predicated region
  $region22: #{conv_block_forward.2} parent=0 // pred_check
    _
  $region23: #{conv_block_forward.2} parent=0 // pred_check_branch
    %697 = sbr.rel (0) target = $region25
  $region24: #{conv_block_forward.2} parent=0 // pred_region
    _
  $region25: #{conv_block_forward.2} parent=0 // pred_fallthru
    _
  // Predicated region
  $region26: #{conv_block_forward.2} parent=0 // pred_check
    _
  $region27: #{conv_block_forward.2} parent=0 // pred_check_branch
    %699 = sbr.rel (0) target = $region29
  $region28: #{conv_block_forward.2} parent=0 // pred_region
    _
  $region29: #{conv_block_forward.2} parent=0 // pred_fallthru
    _
  // Predicated region
  $region30: #{conv_block_forward.2} parent=0 // pred_check
    _
  $region31: #{conv_block_forward.2} parent=0 // pred_check_branch
    %701 = sbr.rel (0) target = $region33
  $region32: #{conv_block_forward.2} parent=0 // pred_region
    _
  $region33: #{conv_block_forward.2} parent=0 // pred_fallthru
    _

// kernel: conv_block_forward.3
$region0: #{conv_block_forward.3}
  #allocation0 [shape = 'u32[]', space=smem, size = 0x4, offset = 0x4, fixed_abs, tag = 'smem constant byte address 0x4 - core index']
  #allocation1 [shape = 'u32[144,128]{1,0:T(1,128)}', space=vmem, size = 0x12000, scoped, tag = 'internal scratch']
  %s0 = inlined_call_operand.vmem [shape: bf16[392,36], index: 0, kind: input, shape index: {}]
  %s1 = inlined_call_operand.vmem [shape: bf16[36,128], index: 1, kind: input, shape index: {}]
  %s2 = inlined_call_operand.vmem [shape: f32[1,128], index: 2, kind: input, shape index: {}]
  %s3 = inlined_call_operand.vmem [shape: f32[1,128], index: 3, kind: input, shape index: {}]
  %s4 = inlined_call_operand.vmem [shape: f32[392,128], index: 4, kind: output, shape index: {}]
  %s5 = sld [smem:[#allocation0]]
  $region26: #{conv_block_forward.3} parent=0
    _
  %s7 = ssub.s32 1, %s5
  %s8 = scalar_select 0, %s7, %s5
  // Predicated region
  $region2: #{conv_block_forward.3} parent=0 // pred_check
    _
  $region3: #{conv_block_forward.3} parent=0 // pred_check_branch
    %10 = sbr.rel (0) target = $region5
  $region4: #{conv_block_forward.3} parent=0 // pred_region
    _
  $region5: #{conv_block_forward.3} parent=0 // pred_fallthru
    _
  // Predicated region
  $region6: #{conv_block_forward.3} parent=0 // pred_check
    _
  $region7: #{conv_block_forward.3} parent=0 // pred_check_branch
    %12 = sbr.rel (0) target = $region9
  $region8: #{conv_block_forward.3} parent=0 // pred_region
    _
  $region9: #{conv_block_forward.3} parent=0 // pred_fallthru
    _
  // Predicated region
  $region10: #{conv_block_forward.3} parent=0 // pred_check
    _
  $region11: #{conv_block_forward.3} parent=0 // pred_check_branch
    %14 = sbr.rel (0) target = $region13
  $region12: #{conv_block_forward.3} parent=0 // pred_region
    _
  $region13: #{conv_block_forward.3} parent=0 // pred_fallthru
    _
  // Predicated region
  $region14: #{conv_block_forward.3} parent=0 // pred_check
    _
  $region15: #{conv_block_forward.3} parent=0 // pred_check_branch
    %16 = sbr.rel (0) target = $region17
  $region16: #{conv_block_forward.3} parent=0 // pred_region
    _
  $region17: #{conv_block_forward.3} parent=0 // pred_fallthru
    _
  %v18 = vld [vmem:[%s0] sm:$0xf]
  %v19 = vld [vmem:[%s0 + $0x4] sm:$0xf]
  %v20 = vld [vmem:[%s0 + $0x8] sm:$0xf]
  %v21 = vld [vmem:[%s0 + $0xc] sm:$0xf]
  %v22 = vld [vmem:[%s0 + $0x10] sm:$0xf]
  %v23 = vld [vmem:[%s0 + $0x14] sm:$0xf]
  %v24 = vld [vmem:[%s0 + $0x18] sm:$0xf]
  %v25 = vld [vmem:[%s0 + $0x1c] sm:$0xf]
  %v26 = vld [vmem:[%s0 + $0x20] sm:$0xf]
  %v27 = vld [vmem:[%s0 + $0x24] sm:$0xf]
  %v28 = vld [vmem:[%s0 + $0x28] sm:$0xf]
  %v29 = vld [vmem:[%s0 + $0x2c] sm:$0xf]
  %v30 = vld [vmem:[%s0 + $0x30] sm:$0xf]
  %v31 = vld [vmem:[%s0 + $0x34] sm:$0xf]
  %v32 = vld [vmem:[%s0 + $0x38] sm:$0xf]
  %v33 = vld [vmem:[%s0 + $0x3c] sm:$0xf]
  %v34 = vld [vmem:[%s0 + $0x40] sm:$0xf]
  %v35 = vld [vmem:[%s0 + $0x44] sm:$0xf]
  %v36 = vld [vmem:[%s0 + $0x48] sm:$0xf]
  %v37 = vld [vmem:[%s0 + $0x4c] sm:$0xf]
  %v38 = vld [vmem:[%s0 + $0x50] sm:$0xf]
  %v39 = vld [vmem:[%s0 + $0x54] sm:$0xf]
  %v40 = vld [vmem:[%s0 + $0x58] sm:$0xf]
  %v41 = vld [vmem:[%s0 + $0x5c] sm:$0xf]
  %v42 = vld [vmem:[%s0 + $0x60] sm:$0xf]
  %v43 = vld [vmem:[%s0 + $0x64] sm:$0xf]
  %v44 = vld [vmem:[%s0 + $0x68] sm:$0xf]
  %v45 = vld [vmem:[%s0 + $0x6c] sm:$0xf]
  %v46 = vld [vmem:[%s0 + $0x70] sm:$0xf]
  %v47 = vld [vmem:[%s0 + $0x74] sm:$0xf]
  %v48 = vld [vmem:[%s0 + $0x78] sm:$0xf]
  %v49 = vld [vmem:[%s0 + $0x7c] sm:$0xf]
  %v50 = vld [vmem:[%s0 + $0x80] sm:$0xf]
  %v51 = vld [vmem:[%s0 + $0x84] sm:$0xf]
  %v52 = vld [vmem:[%s0 + $0x88] sm:$0xf]
  %v53 = vld [vmem:[%s0 + $0x8c] sm:$0xf]
  %v54 = vld [vmem:[%s0 + $0x90] sm:$0xf]
  %v55 = vld [vmem:[%s0 + $0x94] sm:$0xf]
  %v56 = vld [vmem:[%s0 + $0x98] sm:$0xf]
  %v57 = vld [vmem:[%s0 + $0x9c] sm:$0xf]
  %v58 = vld [vmem:[%s0 + $0xa0] sm:$0xf]
  %v59 = vld [vmem:[%s0 + $0xa4] sm:$0xf]
  %v60 = vld [vmem:[%s0 + $0xa8] sm:$0xf]
  %v61 = vld [vmem:[%s0 + $0xac] sm:$0xf]
  %v62 = vld [vmem:[%s0 + $0xb0] sm:$0xf]
  %v63 = vld [vmem:[%s0 + $0xb4] sm:$0xf]
  %v64 = vld [vmem:[%s0 + $0xb8] sm:$0xf]
  %v65 = vld [vmem:[%s0 + $0xbc] sm:$0xf]
  %v66 = vld [vmem:[%s0 + $0xc0] sm:$0xf]
  %v67 = vld [vmem:[%s1] sm:$0xf]
  %v68 = vld [vmem:[%s1 + $0x4] sm:$0xf]
  %v69 = vld [vmem:[%s1 + $0x8] sm:$0xf]
  %v70 = vld [vmem:[%s1 + $0xc] sm:$0xf]
  %v71 = vld [vmem:[%s1 + $0x10] sm:$0x3]
  %v121 = vunpack.c.l.b16 %v18
  %v122 = vunpack.c.l.b16 %v19
  %v123 = vunpack.c.l.b16 %v20
  %v124 = vunpack.c.l.b16 %v21
  %v125 = vunpack.c.l.b16 %v22
  %v126 = vunpack.c.l.b16 %v23
  %v127 = vunpack.c.l.b16 %v24
  %v128 = vunpack.c.l.b16 %v25
  %v129 = vunpack.c.l.b16 %v26
  %v130 = vunpack.c.l.b16 %v27
  %v131 = vunpack.c.l.b16 %v28
  %v132 = vunpack.c.l.b16 %v29
  %v133 = vunpack.c.l.b16 %v30
  %v134 = vunpack.c.l.b16 %v31
  %v135 = vunpack.c.l.b16 %v32
  %v136 = vunpack.c.l.b16 %v33
  %v137 = vunpack.c.l.b16 %v34
  %v138 = vunpack.c.l.b16 %v35
  %v139 = vunpack.c.l.b16 %v36
  %v140 = vunpack.c.l.b16 %v37
  %v141 = vunpack.c.l.b16 %v38
  %v142 = vunpack.c.l.b16 %v39
  %v143 = vunpack.c.l.b16 %v40
  %v144 = vunpack.c.l.b16 %v41
  %v145 = vunpack.c.l.b16 %v42
  %v146 = vunpack.c.l.b16 %v43
  %v147 = vunpack.c.l.b16 %v44
  %v148 = vunpack.c.l.b16 %v45
  %v149 = vunpack.c.l.b16 %v46
  %v150 = vunpack.c.l.b16 %v47
  %v151 = vunpack.c.l.b16 %v48
  %v152 = vunpack.c.l.b16 %v49
  %v153 = vunpack.c.l.b16 %v50
  %v154 = vunpack.c.l.b16 %v51
  %v155 = vunpack.c.l.b16 %v52
  %v156 = vunpack.c.l.b16 %v53
  %v157 = vunpack.c.l.b16 %v54
  %v158 = vunpack.c.l.b16 %v55
  %v159 = vunpack.c.l.b16 %v56
  %v160 = vunpack.c.l.b16 %v57
  %v161 = vunpack.c.l.b16 %v58
  %v162 = vunpack.c.l.b16 %v59
  %v163 = vunpack.c.l.b16 %v60
  %v164 = vunpack.c.l.b16 %v61
  %v165 = vunpack.c.l.b16 %v62
  %v166 = vunpack.c.l.b16 %v63
  %v167 = vunpack.c.l.b16 %v64
  %v168 = vunpack.c.l.b16 %v65
  %v169 = vunpack.c.l.b16 %v66
  %v170 = vpack.c.b16 %v122, %v121
  %v171 = vpack.c.b16 %v124, %v123
  %v172 = vpack.c.b16 %v126, %v125
  %v173 = vpack.c.b16 %v128, %v127
  %v174 = vpack.c.b16 %v130, %v129
  %v175 = vpack.c.b16 %v132, %v131
  %v176 = vpack.c.b16 %v134, %v133
  %v177 = vpack.c.b16 %v136, %v135
  %v178 = vpack.c.b16 %v138, %v137
  %v179 = vpack.c.b16 %v140, %v139
  %v180 = vpack.c.b16 %v142, %v141
  %v181 = vpack.c.b16 %v144, %v143
  %v182 = vpack.c.b16 %v146, %v145
  %v183 = vpack.c.b16 %v148, %v147
  %v184 = vpack.c.b16 %v150, %v149
  %v185 = vpack.c.b16 %v152, %v151
  %v186 = vpack.c.b16 %v154, %v153
  %v187 = vpack.c.b16 %v156, %v155
  %v188 = vpack.c.b16 %v158, %v157
  %v189 = vpack.c.b16 %v160, %v159
  %v190 = vpack.c.b16 %v162, %v161
  %v191 = vpack.c.b16 %v164, %v163
  %v192 = vpack.c.b16 %v166, %v165
  %v193 = vpack.c.b16 %v168, %v167
  %v194 = vpack.c.b16 %v169, %v169
  %v200 = vunpack.c.l.b16 %v67
  %v201 = vunpack.c.l.b16 %v68
  %v202 = vunpack.c.l.b16 %v69
  %v203 = vunpack.c.l.b16 %v70
  %v204 = vunpack.c.l.b16 %v71
  %v205 = vpack.c.b16 %v201, %v200
  %v206 = vpack.c.b16 %v203, %v202
  %v207 = vpack.c.b16 %v204, %v204
  %vm210 = vcmask 293888
  %v212 = vsel %vm210, %v170, 0
  %v215 = vsel %vm210, %v171, 0
  %v218 = vsel %vm210, %v172, 0
  %v221 = vsel %vm210, %v173, 0
  %v224 = vsel %vm210, %v174, 0
  %v227 = vsel %vm210, %v175, 0
  %v230 = vsel %vm210, %v176, 0
  %v233 = vsel %vm210, %v177, 0
  %v236 = vsel %vm210, %v178, 0
  %v239 = vsel %vm210, %v179, 0
  %v242 = vsel %vm210, %v180, 0
  %v245 = vsel %vm210, %v181, 0
  %v248 = vsel %vm210, %v182, 0
  %v251 = vsel %vm210, %v183, 0
  %v254 = vsel %vm210, %v184, 0
  %v257 = vsel %vm210, %v185, 0
  %v260 = vsel %vm210, %v186, 0
  %v263 = vsel %vm210, %v187, 0
  %v266 = vsel %vm210, %v188, 0
  %v269 = vsel %vm210, %v189, 0
  %v272 = vsel %vm210, %v190, 0
  %v275 = vsel %vm210, %v191, 0
  %v278 = vsel %vm210, %v192, 0
  %v281 = vsel %vm210, %v193, 0
  %v284 = vsel %vm210, %v194, 0
  %vm286 = vcmask 1041408
  %v288 = vsel %vm286, %v207, 0
  %290 = vmatprep.subr.bf16.mxu0 0
  %291 = vmatpush1.bf16.msra.mxu0 %v205
  %292 = vmatprep.subr.bf16.mxu0 0
  %293 = vmatpush1.bf16.msra.mxu0 %v206
  %294 = vmatprep.subr.bf16.mxu0 0
  %295 = vmatpush1.bf16.msra.mxu0 %v288
  %296 = vmatprep.subr.bf16.mxu0 0
  %297 = vmatpush1.bf16.msra.mxu0 0
  %298 = vmatprep.subr.bf16.mxu0 0
  %299 = vmatpush1.bf16.msra.mxu0 0
  %300 = vmatprep.subr.bf16.mxu0 0
  %301 = vmatpush1.bf16.msra.mxu0 0
  %302 = vmatprep.subr.bf16.mxu0 0
  %303 = vmatpush1.bf16.msra.mxu0 0
  %304 = vmatprep.subr.bf16.mxu0 0
  %305 = vmatpush1.bf16.msra.mxu0 0
  %306 = vmatprep.subr.bf16.mxu0 0
  %307 = vmatpush1.bf16.msra.mxu0 0
  %308 = vmatprep.subr.bf16.mxu0 0
  %309 = vmatpush1.bf16.msra.mxu0 0
  %310 = vmatprep.subr.bf16.mxu0 0
  %311 = vmatpush1.bf16.msra.mxu0 0
  %312 = vmatprep.subr.bf16.mxu0 0
  %313 = vmatpush1.bf16.msra.mxu0 0
  %314 = vmatprep.subr.bf16.mxu0 0
  %315 = vmatpush1.bf16.msra.mxu0 0
  %316 = vmatprep.subr.bf16.mxu0 0
  %317 = vmatpush1.bf16.msra.mxu0 0
  %318 = vmatprep.subr.bf16.mxu0 0
  %319 = vmatpush1.bf16.msra.mxu0 0
  %320 = vmatprep.subr.bf16.mxu0 0
  %321 = vmatpush1.bf16.msra.mxu0 0
  %322 = vmatprep.mubr.bf16.mxu0 0
  %323 = vmatmul.mubr.bf16.gmra.mrb[0].mxu0 %v212
  %v324 = vpop.f32.mrb[0].mxu0
  %v325 = vadd.f32 0.0, %v324
  %v326 = vpop.f32.mrb[0].mxu0
  %v327 = vpop.f32.mrb[0].mxu0
  %v328 = vadd.f32 0.0, %v327
  %v329 = vpop.f32.mrb[0].mxu0
  %330 = vmatprep.mubr.bf16.mxu0 0
  %331 = vmatmul.mubr.bf16.gmra.mrb[0].mxu0 %v215
  %v332 = vpop.f32.mrb[0].mxu0
  %v333 = vadd.f32 0.0, %v332
  %v334 = vpop.f32.mrb[0].mxu0
  %v335 = vpop.f32.mrb[0].mxu0
  %v336 = vadd.f32 0.0, %v335
  %v337 = vpop.f32.mrb[0].mxu0
  %338 = vmatprep.mubr.bf16.mxu0 0
  %339 = vmatmul.mubr.bf16.gmra.mrb[0].mxu0 %v218
  %v340 = vpop.f32.mrb[0].mxu0
  %v341 = vadd.f32 0.0, %v340
  %v342 = vpop.f32.mrb[0].mxu0
  %v343 = vpop.f32.mrb[0].mxu0
  %v344 = vadd.f32 0.0, %v343
  %v345 = vpop.f32.mrb[0].mxu0
  %346 = vmatprep.mubr.bf16.mxu0 0
  %347 = vmatmul.mubr.bf16.gmra.mrb[0].mxu0 %v221
  %v348 = vpop.f32.mrb[0].mxu0
  %v349 = vadd.f32 0.0, %v348
  %v350 = vpop.f32.mrb[0].mxu0
  %v351 = vpop.f32.mrb[0].mxu0
  %v352 = vadd.f32 0.0, %v351
  %v353 = vpop.f32.mrb[0].mxu0
  %354 = vmatprep.mubr.bf16.mxu0 0
  %355 = vmatmul.mubr.bf16.gmra.mrb[0].mxu0 %v224
  %v356 = vpop.f32.mrb[0].mxu0
  %v357 = vadd.f32 0.0, %v356
  %v358 = vpop.f32.mrb[0].mxu0
  %v359 = vpop.f32.mrb[0].mxu0
  %v360 = vadd.f32 0.0, %v359
  %v361 = vpop.f32.mrb[0].mxu0
  %362 = vmatprep.mubr.bf16.mxu0 0
  %363 = vmatmul.mubr.bf16.gmra.mrb[0].mxu0 %v227
  %v364 = vpop.f32.mrb[0].mxu0
  %v365 = vadd.f32 0.0, %v364
  %v366 = vpop.f32.mrb[0].mxu0
  %v367 = vpop.f32.mrb[0].mxu0
  %v368 = vadd.f32 0.0, %v367
  %v369 = vpop.f32.mrb[0].mxu0
  %370 = vmatprep.mubr.bf16.mxu0 0
  %371 = vmatmul.mubr.bf16.gmra.mrb[0].mxu0 %v230
  %v372 = vpop.f32.mrb[0].mxu0
  %v373 = vadd.f32 0.0, %v372
  %v374 = vpop.f32.mrb[0].mxu0
  %v375 = vpop.f32.mrb[0].mxu0
  %v376 = vadd.f32 0.0, %v375
  %v377 = vpop.f32.mrb[0].mxu0
  %378 = vmatprep.mubr.bf16.mxu0 0
  %379 = vmatmul.mubr.bf16.gmra.mrb[0].mxu0 %v233
  %v380 = vpop.f32.mrb[0].mxu0
  %v381 = vadd.f32 0.0, %v380
  %v382 = vpop.f32.mrb[0].mxu0
  %v383 = vpop.f32.mrb[0].mxu0
  %v384 = vadd.f32 0.0, %v383
  %v385 = vpop.f32.mrb[0].mxu0
  %386 = vmatprep.mubr.bf16.mxu0 0
  %387 = vmatmul.mubr.bf16.gmra.mrb[0].mxu0 %v236
  %v388 = vpop.f32.mrb[0].mxu0
  %v389 = vadd.f32 0.0, %v388
  %v390 = vpop.f32.mrb[0].mxu0
  %v391 = vpop.f32.mrb[0].mxu0
  %v392 = vadd.f32 0.0, %v391
  %v393 = vpop.f32.mrb[0].mxu0
  %394 = vmatprep.mubr.bf16.mxu0 0
  %395 = vmatmul.mubr.bf16.gmra.mrb[0].mxu0 %v239
  %v396 = vpop.f32.mrb[0].mxu0
  %v397 = vadd.f32 0.0, %v396
  %v398 = vpop.f32.mrb[0].mxu0
  %v399 = vpop.f32.mrb[0].mxu0
  %v400 = vadd.f32 0.0, %v399
  %v401 = vpop.f32.mrb[0].mxu0
  %402 = vmatprep.mubr.bf16.mxu0 0
  %403 = vmatmul.mubr.bf16.gmra.mrb[0].mxu0 %v242
  %v404 = vpop.f32.mrb[0].mxu0
  %v405 = vadd.f32 0.0, %v404
  %v406 = vpop.f32.mrb[0].mxu0
  %v407 = vpop.f32.mrb[0].mxu0
  %v408 = vadd.f32 0.0, %v407
  %v409 = vpop.f32.mrb[0].mxu0
  %410 = vmatprep.mubr.bf16.mxu0 0
  %411 = vmatmul.mubr.bf16.gmra.mrb[0].mxu0 %v245
  %v412 = vpop.f32.mrb[0].mxu0
  %v413 = vadd.f32 0.0, %v412
  %v414 = vpop.f32.mrb[0].mxu0
  %v415 = vpop.f32.mrb[0].mxu0
  %v416 = vadd.f32 0.0, %v415
  %v417 = vpop.f32.mrb[0].mxu0
  %418 = vmatprep.mubr.bf16.mxu0 0
  %419 = vmatmul.mubr.bf16.gmra.mrb[0].mxu0 %v248
  %v420 = vpop.f32.mrb[0].mxu0
  %v421 = vadd.f32 0.0, %v420
  %v422 = vpop.f32.mrb[0].mxu0
  %v423 = vpop.f32.mrb[0].mxu0
  %v424 = vadd.f32 0.0, %v423
  %v425 = vpop.f32.mrb[0].mxu0
  %426 = vmatprep.mubr.bf16.mxu0 0
  %427 = vmatmul.mubr.bf16.gmra.mrb[0].mxu0 %v251
  %v428 = vpop.f32.mrb[0].mxu0
  %v429 = vadd.f32 0.0, %v428
  %v430 = vpop.f32.mrb[0].mxu0
  %v431 = vpop.f32.mrb[0].mxu0
  %v432 = vadd.f32 0.0, %v431
  %v433 = vpop.f32.mrb[0].mxu0
  %434 = vmatprep.mubr.bf16.mxu0 0
  %435 = vmatmul.mubr.bf16.gmra.mrb[0].mxu0 %v254
  %v436 = vpop.f32.mrb[0].mxu0
  %v437 = vadd.f32 0.0, %v436
  %v438 = vpop.f32.mrb[0].mxu0
  %v439 = vpop.f32.mrb[0].mxu0
  %v440 = vadd.f32 0.0, %v439
  %v441 = vpop.f32.mrb[0].mxu0
  %442 = vmatprep.mubr.bf16.mxu0 0
  %443 = vmatmul.mubr.bf16.gmra.mrb[0].mxu0 %v257
  %v444 = vpop.f32.mrb[0].mxu0
  %v445 = vadd.f32 0.0, %v444
  %v446 = vpop.f32.mrb[0].mxu0
  %v447 = vpop.f32.mrb[0].mxu0
  %v448 = vadd.f32 0.0, %v447
  %v449 = vpop.f32.mrb[0].mxu0
  %450 = vmatprep.mubr.bf16.mxu0 0
  %451 = vmatmul.mubr.bf16.gmra.mrb[0].mxu0 %v260
  %v452 = vpop.f32.mrb[0].mxu0
  %v453 = vadd.f32 0.0, %v452
  %v454 = vpop.f32.mrb[0].mxu0
  %v455 = vpop.f32.mrb[0].mxu0
  %v456 = vadd.f32 0.0, %v455
  %v457 = vpop.f32.mrb[0].mxu0
  %458 = vmatprep.mubr.bf16.mxu0 0
  %459 = vmatmul.mubr.bf16.gmra.mrb[0].mxu0 %v263
  %v460 = vpop.f32.mrb[0].mxu0
  %v461 = vadd.f32 0.0, %v460
  %v462 = vpop.f32.mrb[0].mxu0
  %v463 = vpop.f32.mrb[0].mxu0
  %v464 = vadd.f32 0.0, %v463
  %v465 = vpop.f32.mrb[0].mxu0
  %466 = vmatprep.mubr.bf16.mxu0 0
  %467 = vmatmul.mubr.bf16.gmra.mrb[0].mxu0 %v266
  %v468 = vpop.f32.mrb[0].mxu0
  %v469 = vadd.f32 0.0, %v468
  %v470 = vpop.f32.mrb[0].mxu0
  %v471 = vpop.f32.mrb[0].mxu0
  %v472 = vadd.f32 0.0, %v471
  %v473 = vpop.f32.mrb[0].mxu0
  %474 = vmatprep.mubr.bf16.mxu0 0
  %475 = vmatmul.mubr.bf16.gmra.mrb[0].mxu0 %v269
  %v476 = vpop.f32.mrb[0].mxu0
  %v477 = vadd.f32 0.0, %v476
  %v478 = vpop.f32.mrb[0].mxu0
  %v479 = vpop.f32.mrb[0].mxu0
  %v480 = vadd.f32 0.0, %v479
  %v481 = vpop.f32.mrb[0].mxu0
  %482 = vmatprep.mubr.bf16.mxu0 0
  %483 = vmatmul.mubr.bf16.gmra.mrb[0].mxu0 %v272
  %v484 = vpop.f32.mrb[0].mxu0
  %v485 = vadd.f32 0.0, %v484
  %v486 = vpop.f32.mrb[0].mxu0
  %v487 = vpop.f32.mrb[0].mxu0
  %v488 = vadd.f32 0.0, %v487
  %v489 = vpop.f32.mrb[0].mxu0
  %490 = vmatprep.mubr.bf16.mxu0 0
  %491 = vmatmul.mubr.bf16.gmra.mrb[0].mxu0 %v275
  %v492 = vpop.f32.mrb[0].mxu0
  %v493 = vadd.f32 0.0, %v492
  %v494 = vpop.f32.mrb[0].mxu0
  %v495 = vpop.f32.mrb[0].mxu0
  %v496 = vadd.f32 0.0, %v495
  %v497 = vpop.f32.mrb[0].mxu0
  %498 = vmatprep.mubr.bf16.mxu0 0
  %499 = vmatmul.mubr.bf16.gmra.mrb[0].mxu0 %v278
  %v500 = vpop.f32.mrb[0].mxu0
  %v501 = vadd.f32 0.0, %v500
  %v502 = vpop.f32.mrb[0].mxu0
  %v503 = vpop.f32.mrb[0].mxu0
  %v504 = vadd.f32 0.0, %v503
  %v505 = vpop.f32.mrb[0].mxu0
  %506 = vmatprep.mubr.bf16.mxu0 0
  %507 = vmatmul.mubr.bf16.gmra.mrb[0].mxu0 %v281
  %v508 = vpop.f32.mrb[0].mxu0
  %v509 = vadd.f32 0.0, %v508
  %v510 = vpop.f32.mrb[0].mxu0
  %v511 = vpop.f32.mrb[0].mxu0
  %v512 = vadd.f32 0.0, %v511
  %v513 = vpop.f32.mrb[0].mxu0
  %514 = vmatprep.mubr.bf16.mxu0 0
  %515 = vmatmul.mubr.bf16.gmra.mrb[0].mxu0 %v284
  %v516 = vpop.f32.mrb[0].mxu0
  %v517 = vadd.f32 0.0, %v516
  %v518 = vpop.f32.mrb[0].mxu0
  %v519 = vpop.f32.mrb[0].mxu0
  %v520 = vpop.f32.mrb[0].mxu0
  %521 = vdwg.mxu0
  %v522 = vld [vmem:[%s2] sm:$0x1]
  %v524 = vlaneseq
  %v525 = vshrl.u32 %v524, 7
  %v526 = vsub.s32 0, %v525
  %v527 = vrot.slane %v522, %v526
  %v529 = vmul.f32 %v325, %v527
  %v530 = vmul.f32 %v328, %v527
  %v531 = vmul.f32 %v333, %v527
  %v532 = vmul.f32 %v336, %v527
  %v533 = vmul.f32 %v341, %v527
  %v534 = vmul.f32 %v344, %v527
  %v535 = vmul.f32 %v349, %v527
  %v536 = vmul.f32 %v352, %v527
  %v537 = vmul.f32 %v357, %v527
  %v538 = vmul.f32 %v360, %v527
  %v539 = vmul.f32 %v365, %v527
  %v540 = vmul.f32 %v368, %v527
  %v541 = vmul.f32 %v373, %v527
  %v542 = vmul.f32 %v376, %v527
  %v543 = vmul.f32 %v381, %v527
  %v544 = vmul.f32 %v384, %v527
  %v545 = vmul.f32 %v389, %v527
  %v546 = vmul.f32 %v392, %v527
  %v547 = vmul.f32 %v397, %v527
  %v548 = vmul.f32 %v400, %v527
  %v549 = vmul.f32 %v405, %v527
  %v550 = vmul.f32 %v408, %v527
  %v551 = vmul.f32 %v413, %v527
  %v552 = vmul.f32 %v416, %v527
  %v553 = vmul.f32 %v421, %v527
  %v554 = vmul.f32 %v424, %v527
  %v555 = vmul.f32 %v429, %v527
  %v556 = vmul.f32 %v432, %v527
  %v557 = vmul.f32 %v437, %v527
  %v558 = vmul.f32 %v440, %v527
  %v559 = vmul.f32 %v445, %v527
  %v560 = vmul.f32 %v448, %v527
  %v561 = vmul.f32 %v453, %v527
  %v562 = vmul.f32 %v456, %v527
  %v563 = vmul.f32 %v461, %v527
  %v564 = vmul.f32 %v464, %v527
  %v565 = vmul.f32 %v469, %v527
  %v566 = vmul.f32 %v472, %v527
  %v567 = vmul.f32 %v477, %v527
  %v568 = vmul.f32 %v480, %v527
  %v569 = vmul.f32 %v485, %v527
  %v570 = vmul.f32 %v488, %v527
  %v571 = vmul.f32 %v493, %v527
  %v572 = vmul.f32 %v496, %v527
  %v573 = vmul.f32 %v501, %v527
  %v574 = vmul.f32 %v504, %v527
  %v575 = vmul.f32 %v509, %v527
  %v576 = vmul.f32 %v512, %v527
  %v577 = vmul.f32 %v517, %v527
  %v578 = vld [vmem:[%s3] sm:$0x1]
  %v580 = vlaneseq
  %v581 = vshrl.u32 %v580, 7
  %v582 = vsub.s32 0, %v581
  %v583 = vrot.slane %v578, %v582
  %v585 = vadd.f32 %v529, %v583
  %v586 = vadd.f32 %v530, %v583
  %v587 = vadd.f32 %v531, %v583
  %v588 = vadd.f32 %v532, %v583
  %v589 = vadd.f32 %v533, %v583
  %v590 = vadd.f32 %v534, %v583
  %v591 = vadd.f32 %v535, %v583
  %v592 = vadd.f32 %v536, %v583
  %v593 = vadd.f32 %v537, %v583
  %v594 = vadd.f32 %v538, %v583
  %v595 = vadd.f32 %v539, %v583
  %v596 = vadd.f32 %v540, %v583
  %v597 = vadd.f32 %v541, %v583
  %v598 = vadd.f32 %v542, %v583
  %v599 = vadd.f32 %v543, %v583
  %v600 = vadd.f32 %v544, %v583
  %v601 = vadd.f32 %v545, %v583
  %v602 = vadd.f32 %v546, %v583
  %v603 = vadd.f32 %v547, %v583
  %v604 = vadd.f32 %v548, %v583
  %v605 = vadd.f32 %v549, %v583
  %v606 = vadd.f32 %v550, %v583
  %v607 = vadd.f32 %v551, %v583
  %v608 = vadd.f32 %v552, %v583
  %v609 = vadd.f32 %v553, %v583
  %v610 = vadd.f32 %v554, %v583
  %v611 = vadd.f32 %v555, %v583
  %v612 = vadd.f32 %v556, %v583
  %v613 = vadd.f32 %v557, %v583
  %v614 = vadd.f32 %v558, %v583
  %v615 = vadd.f32 %v559, %v583
  %v616 = vadd.f32 %v560, %v583
  %v617 = vadd.f32 %v561, %v583
  %v618 = vadd.f32 %v562, %v583
  %v619 = vadd.f32 %v563, %v583
  %v620 = vadd.f32 %v564, %v583
  %v621 = vadd.f32 %v565, %v583
  %v622 = vadd.f32 %v566, %v583
  %v623 = vadd.f32 %v567, %v583
  %v624 = vadd.f32 %v568, %v583
  %v625 = vadd.f32 %v569, %v583
  %v626 = vadd.f32 %v570, %v583
  %v627 = vadd.f32 %v571, %v583
  %v628 = vadd.f32 %v572, %v583
  %v629 = vadd.f32 %v573, %v583
  %v630 = vadd.f32 %v574, %v583
  %v631 = vadd.f32 %v575, %v583
  %v632 = vadd.f32 %v576, %v583
  %v633 = vadd.f32 %v577, %v583
  %v634 = vmax.f32 %v585, 0.0
  %v635 = vmax.f32 %v586, 0.0
  %v636 = vmax.f32 %v587, 0.0
  %v637 = vmax.f32 %v588, 0.0
  %v638 = vmax.f32 %v589, 0.0
  %v639 = vmax.f32 %v590, 0.0
  %v640 = vmax.f32 %v591, 0.0
  %v641 = vmax.f32 %v592, 0.0
  %v642 = vmax.f32 %v593, 0.0
  %v643 = vmax.f32 %v594, 0.0
  %v644 = vmax.f32 %v595, 0.0
  %v645 = vmax.f32 %v596, 0.0
  %v646 = vmax.f32 %v597, 0.0
  %v647 = vmax.f32 %v598, 0.0
  %v648 = vmax.f32 %v599, 0.0
  %v649 = vmax.f32 %v600, 0.0
  %v650 = vmax.f32 %v601, 0.0
  %v651 = vmax.f32 %v602, 0.0
  %v652 = vmax.f32 %v603, 0.0
  %v653 = vmax.f32 %v604, 0.0
  %v654 = vmax.f32 %v605, 0.0
  %v655 = vmax.f32 %v606, 0.0
  %v656 = vmax.f32 %v607, 0.0
  %v657 = vmax.f32 %v608, 0.0
  %v658 = vmax.f32 %v609, 0.0
  %v659 = vmax.f32 %v610, 0.0
  %v660 = vmax.f32 %v611, 0.0
  %v661 = vmax.f32 %v612, 0.0
  %v662 = vmax.f32 %v613, 0.0
  %v663 = vmax.f32 %v614, 0.0
  %v664 = vmax.f32 %v615, 0.0
  %v665 = vmax.f32 %v616, 0.0
  %v666 = vmax.f32 %v617, 0.0
  %v667 = vmax.f32 %v618, 0.0
  %v668 = vmax.f32 %v619, 0.0
  %v669 = vmax.f32 %v620, 0.0
  %v670 = vmax.f32 %v621, 0.0
  %v671 = vmax.f32 %v622, 0.0
  %v672 = vmax.f32 %v623, 0.0
  %v673 = vmax.f32 %v624, 0.0
  %v674 = vmax.f32 %v625, 0.0
  %v675 = vmax.f32 %v626, 0.0
  %v676 = vmax.f32 %v627, 0.0
  %v677 = vmax.f32 %v628, 0.0
  %v678 = vmax.f32 %v629, 0.0
  %v679 = vmax.f32 %v630, 0.0
  %v680 = vmax.f32 %v631, 0.0
  %v681 = vmax.f32 %v632, 0.0
  %v682 = vmax.f32 %v633, 0.0
  %683 = vst [vmem:[%s4] sm:$0xff] %v634
  %684 = vst [vmem:[%s4 + $0x8] sm:$0xff] %v635
  %685 = vst [vmem:[%s4 + $0x10] sm:$0xff] %v636
  %686 = vst [vmem:[%s4 + $0x18] sm:$0xff] %v637
  %687 = vst [vmem:[%s4 + $0x20] sm:$0xff] %v638
  %688 = vst [vmem:[%s4 + $0x28] sm:$0xff] %v639
  %689 = vst [vmem:[%s4 + $0x30] sm:$0xff] %v640
  %690 = vst [vmem:[%s4 + $0x38] sm:$0xff] %v641
  %691 = vst [vmem:[%s4 + $0x40] sm:$0xff] %v642
  %692 = vst [vmem:[%s4 + $0x48] sm:$0xff] %v643
  %693 = vst [vmem:[%s4 + $0x50] sm:$0xff] %v644
  %694 = vst [vmem:[%s4 + $0x58] sm:$0xff] %v645
  %695 = vst [vmem:[%s4 + $0x60] sm:$0xff] %v646
  %696 = vst [vmem:[%s4 + $0x68] sm:$0xff] %v647
  %697 = vst [vmem:[%s4 + $0x70] sm:$0xff] %v648
  %698 = vst [vmem:[%s4 + $0x78] sm:$0xff] %v649
  %699 = vst [vmem:[%s4 + $0x80] sm:$0xff] %v650
  %700 = vst [vmem:[%s4 + $0x88] sm:$0xff] %v651
  %701 = vst [vmem:[%s4 + $0x90] sm:$0xff] %v652
  %702 = vst [vmem:[%s4 + $0x98] sm:$0xff] %v653
  %703 = vst [vmem:[%s4 + $0xa0] sm:$0xff] %v654
  %704 = vst [vmem:[%s4 + $0xa8] sm:$0xff] %v655
  %705 = vst [vmem:[%s4 + $0xb0] sm:$0xff] %v656
  %706 = vst [vmem:[%s4 + $0xb8] sm:$0xff] %v657
  %707 = vst [vmem:[%s4 + $0xc0] sm:$0xff] %v658
  %708 = vst [vmem:[%s4 + $0xc8] sm:$0xff] %v659
  %709 = vst [vmem:[%s4 + $0xd0] sm:$0xff] %v660
  %710 = vst [vmem:[%s4 + $0xd8] sm:$0xff] %v661
  %711 = vst [vmem:[%s4 + $0xe0] sm:$0xff] %v662
  %712 = vst [vmem:[%s4 + $0xe8] sm:$0xff] %v663
  %713 = vst [vmem:[%s4 + $0xf0] sm:$0xff] %v664
  %714 = vst [vmem:[%s4 + $0xf8] sm:$0xff] %v665
  %715 = vst [vmem:[%s4 + $0x100] sm:$0xff] %v666
  %716 = vst [vmem:[%s4 + $0x108] sm:$0xff] %v667
  %717 = vst [vmem:[%s4 + $0x110] sm:$0xff] %v668
  %718 = vst [vmem:[%s4 + $0x118] sm:$0xff] %v669
  %719 = vst [vmem:[%s4 + $0x120] sm:$0xff] %v670
  %720 = vst [vmem:[%s4 + $0x128] sm:$0xff] %v671
  %721 = vst [vmem:[%s4 + $0x130] sm:$0xff] %v672
  %722 = vst [vmem:[%s4 + $0x138] sm:$0xff] %v673
  %723 = vst [vmem:[%s4 + $0x140] sm:$0xff] %v674
  %724 = vst [vmem:[%s4 + $0x148] sm:$0xff] %v675
  %725 = vst [vmem:[%s4 + $0x150] sm:$0xff] %v676
  %726 = vst [vmem:[%s4 + $0x158] sm:$0xff] %v677
  %727 = vst [vmem:[%s4 + $0x160] sm:$0xff] %v678
  %728 = vst [vmem:[%s4 + $0x168] sm:$0xff] %v679
  %729 = vst [vmem:[%s4 + $0x170] sm:$0xff] %v680
  %730 = vst [vmem:[%s4 + $0x178] sm:$0xff] %v681
  %731 = vst [vmem:[%s4 + $0x180] sm:$0xff] %v682
  // Predicated region
  $region18: #{conv_block_forward.3} parent=0 // pred_check
    _
  $region19: #{conv_block_forward.3} parent=0 // pred_check_branch
    %733 = sbr.rel (0) target = $region21
  $region20: #{conv_block_forward.3} parent=0 // pred_region
    _
  $region21: #{conv_block_forward.3} parent=0 // pred_fallthru
    _
  // Predicated region
  $region22: #{conv_block_forward.3} parent=0 // pred_check
    _
  $region23: #{conv_block_forward.3} parent=0 // pred_check_branch
    %735 = sbr.rel (0) target = $region25
  $region24: #{conv_block_forward.3} parent=0 // pred_region
    _
  $region25: #{conv_block_forward.3} parent=0 // pred_fallthru
    _

</llo_original>
